<compile_context>
chip_gen: v6e
topology: v6e:2x2x1
jax: 0.10.0
libtpu: 0.0.40
codegen_flags: <defaults>
</compile_context>

<pallas_src>
import jax
import jax.numpy as jnp
from jax.experimental import pallas as pl
from jax.experimental.pallas import tpu as pltpu


# ----------------------------- Pallas kernels -----------------------------

def _ln_withbias_kernel(x_ref, w_ref, b_ref, o_ref):
    # x_ref / o_ref: (C, TH, TW) block (batch dim squeezed)
    # w_ref / b_ref: (C, 1, 1) float32
    x = x_ref[...].astype(jnp.float32)
    c = x.shape[0]
    mu = jnp.sum(x, axis=0, keepdims=True) * (1.0 / c)
    d = x - mu
    var = jnp.sum(d * d, axis=0, keepdims=True) * (1.0 / c)
    y = d * jax.lax.rsqrt(var + 1e-5)
    o_ref[...] = (y * w_ref[...] + b_ref[...]).astype(o_ref.dtype)


def _ln_biasfree_kernel(x_ref, w_ref, o_ref):
    # BiasFree: variance still uses the mean internally (torch.var,
    # unbiased=False), but the mean is NOT subtracted from x in the output.
    x = x_ref[...].astype(jnp.float32)
    c = x.shape[0]
    mu = jnp.sum(x, axis=0, keepdims=True) * (1.0 / c)
    d = x - mu
    var = jnp.sum(d * d, axis=0, keepdims=True) * (1.0 / c)
    y = x * jax.lax.rsqrt(var + 1e-5)
    o_ref[...] = (y * w_ref[...]).astype(o_ref.dtype)


# ----------------------------- tiling heuristic ----------------------------

def _choose_tiles(C, H, W, itemsize, target_block_bytes=4 << 20):
    """Pick (TH, TW) for a (1, C, TH, TW) block.

    TW: multiple of 128 (lane-dense, unmasked stores) or full W if W < 128.
    TH: multiple of 8 or full H if H < 8.
    Grown (W-fastest, for long contiguous DMA runs) up to ~target_block_bytes
    per buffer so 2 in + 2 out double-buffers stay well inside VMEM on all of
    v5e / v6e / v7x.
    """
    if W >= 128:
        tw, max_tw = 128, (W // 128) * 128
    else:
        tw, max_tw = W, W
    if H >= 8:
        th, max_th = 8, (H // 8) * 8
    else:
        th, max_th = H, H

    def nbytes(a, b):
        return C * a * b * itemsize

    while tw * 2 <= max_tw and nbytes(th, tw * 2) <= target_block_bytes:
        tw *= 2
    while th * 2 <= max_th and nbytes(th * 2, tw) <= target_block_bytes:
        th *= 2
    return th, tw


# ----------------------------- wrapper -------------------------------------

def layernorm_nchw(x, weight, bias, *, target_block_bytes=4 << 20):
    """Channel LayerNorm of an NCHW tensor (== to_3d -> LayerNorm(C) -> to_4d)."""
    B, C, H, W = x.shape
    th, tw = _choose_tiles(C, H, W, jnp.dtype(x.dtype).itemsize,
                           target_block_bytes)
    grid = (B, pl.cdiv(H, th), pl.cdiv(W, tw))

    # Batch dim squeezed out of the kernel view -> kernel sees (C, TH, TW).
    x_spec = pl.BlockSpec((None, C, th, tw), lambda b, i, j: (b, 0, i, j))
    p_spec = pl.BlockSpec((C, 1, 1), lambda b, i, j: (0, 0, 0))

    # Hoist the f32 cast of the params out of the kernel.
    w3 = weight.astype(jnp.float32).reshape(C, 1, 1)

    if bias is None:
        kernel = _ln_biasfree_kernel
        operands = (x, w3)
        in_specs = [x_spec, p_spec]
    else:
        kernel = _ln_withbias_kernel
        b3 = bias.astype(jnp.float32).reshape(C, 1, 1)
        operands = (x, w3, b3)
        in_specs = [x_spec, p_spec, p_spec]

    return pl.pallas_call(
        kernel,
        out_shape=jax.ShapeDtypeStruct((B, C, H, W), x.dtype),
        grid_spec=pltpu.PrefetchScalarGridSpec(
            num_scalar_prefetch=0,
            grid=grid,
            in_specs=in_specs,
            out_specs=x_spec,
        ),
        compiler_params=pltpu.CompilerParams(
            dimension_semantics=("parallel", "parallel", "parallel"),
            vmem_limit_bytes=32 * 1024 * 1024,
        ),
    )(*operands)


class LayerNormPallas:
    """Pallas equivalent of the PyTorch LayerNorm(dim, LayerNorm_type) module.

    Parameters are initialized deterministically exactly as in __init__:
    weight = ones(dim); bias = zeros(dim) only for 'WithBias'.
    """

    def __init__(self, dim, layernorm_type):
        self.dim = dim
        self.layernorm_type = layernorm_type
        self.weight = jnp.ones((dim,), dtype=jnp.float32)
        if layernorm_type == 'BiasFree':
            self.bias = None
        else:
            self.bias = jnp.zeros((dim,), dtype=jnp.float32)

    def __call__(self, x):
        b, c, h, w = x.shape
        assert c == self.dim
        return layernorm_nchw(x, self.weight, self.bias)


# ----------------------------- reference (pure JAX) ------------------------

def _ref_layernorm(x, weight, bias, layernorm_type):
    xf = x.astype(jnp.float32)
    mu = jnp.mean(xf, axis=1, keepdims=True)
    var = jnp.mean((xf - mu) ** 2, axis=1, keepdims=True)
    w = weight.astype(jnp.float32).reshape(1, -1, 1, 1)
    if layernorm_type == 'BiasFree':
        y = xf / jnp.sqrt(var + 1e-5) * w
    else:
        y = (xf - mu) / jnp.sqrt(var + 1e-5) * w \
            + bias.astype(jnp.float32).reshape(1, -1, 1, 1)
    return y.astype(x.dtype)


# ----------------------------- main ----------------------------------------

if __name__ == "__main__":
    key = jax.random.PRNGKey(0)
    k1, k2 = jax.random.split(key)

    ok = True

    # Small shape matching the module's typical use (NCHW).
    x_small = jax.random.normal(k1, (2, 4, 16, 16), dtype=jnp.float32)
    # A slightly larger case that exercises the 128-lane tiled path.
    x_large = jax.random.normal(k2, (1, 48, 32, 128), dtype=jnp.float32)

    for xin in (x_small, x_large):
        c = xin.shape[1]
        for ln_type in ("WithBias", "BiasFree"):
            mod = LayerNormPallas(c, ln_type)
            out = jax.block_until_ready(mod(xin))
            ref = _ref_layernorm(xin, mod.weight, mod.bias, ln_type)
            err = float(jnp.max(jnp.abs(out - ref)))
            if not (out.shape == xin.shape and err < 1e-4):
                ok = False
                print(f"MISMATCH type={ln_type} shape={xin.shape} err={err}")

    if ok:
        print("KERNEL_OK")
</pallas_src>

<mosaic_0001>
module attributes {stable_mosaic.version = 11 : i64} {
  func.func @_ln_withbias_kernel(%arg0: i32, %arg1: i32, %arg2: i32, %arg3: memref<1x4x16x16xf32, #tpu.memory_space<vmem>>, %arg4: memref<4x1x1xf32, #tpu.memory_space<vmem>>, %arg5: memref<4x1x1xf32, #tpu.memory_space<vmem>>, %arg6: memref<1x4x16x16xf32, #tpu.memory_space<vmem>>) attributes {dimension_semantics = [#tpu.dimension_semantics<parallel>, #tpu.dimension_semantics<parallel>, #tpu.dimension_semantics<parallel>], iteration_bounds = array<i64: 2, 1, 1>, scalar_prefetch = 0 : i64, scratch_operands = 0 : i64, tpu.core_type = #tpu.core_type<tc>, window_params = [{transform_indices = @transform_0, window_bounds = array<i64: 1, 4, 16, 16>}, {pipeline_mode = #tpu.pipeline_mode<synchronous>, transform_indices = @transform_1, window_bounds = array<i64: 4, 1, 1>}, {pipeline_mode = #tpu.pipeline_mode<synchronous>, transform_indices = @transform_2, window_bounds = array<i64: 4, 1, 1>}, {transform_indices = @transform_3, window_bounds = array<i64: 1, 4, 16, 16>}]} {
    %c0 = arith.constant 0 : index
    %c0_0 = arith.constant 0 : index
    %c0_1 = arith.constant 0 : index
    %c0_2 = arith.constant 0 : index
    %0 = vector.load %arg3[%c0, %c0_0, %c0_1, %c0_2] : memref<1x4x16x16xf32, #tpu.memory_space<vmem>>, vector<1x4x16x16xf32>
    %1 = vector.shape_cast %0 : vector<1x4x16x16xf32> to vector<4x16x16xf32>
    %cst = arith.constant dense<0.000000e+00> : vector<16x16xf32>
    %2 = vector.multi_reduction <add>, %1, %cst [0] : vector<4x16x16xf32> to vector<16x16xf32>
    %3 = vector.shape_cast %2 : vector<16x16xf32> to vector<1x16x16xf32>
    %cst_3 = arith.constant 2.500000e-01 : f32
    %4 = vector.broadcast %cst_3 : f32 to vector<1x16x16xf32>
    %5 = arith.mulf %3, %4 : vector<1x16x16xf32>
    %6 = vector.broadcast %5 : vector<1x16x16xf32> to vector<4x16x16xf32>
    %7 = arith.subf %1, %6 : vector<4x16x16xf32>
    %8 = arith.mulf %7, %7 : vector<4x16x16xf32>
    %cst_4 = arith.constant dense<0.000000e+00> : vector<16x16xf32>
    %9 = vector.multi_reduction <add>, %8, %cst_4 [0] : vector<4x16x16xf32> to vector<16x16xf32>
    %10 = vector.shape_cast %9 : vector<16x16xf32> to vector<1x16x16xf32>
    %cst_5 = arith.constant 2.500000e-01 : f32
    %11 = vector.broadcast %cst_5 : f32 to vector<1x16x16xf32>
    %12 = arith.mulf %10, %11 : vector<1x16x16xf32>
    %cst_6 = arith.constant 9.99999974E-6 : f32
    %13 = vector.broadcast %cst_6 : f32 to vector<1x16x16xf32>
    %14 = arith.addf %12, %13 : vector<1x16x16xf32>
    %15 = math.rsqrt %14 : vector<1x16x16xf32>
    %16 = vector.broadcast %15 : vector<1x16x16xf32> to vector<4x16x16xf32>
    %17 = arith.mulf %7, %16 : vector<4x16x16xf32>
    %c0_7 = arith.constant 0 : index
    %c0_8 = arith.constant 0 : index
    %c0_9 = arith.constant 0 : index
    %18 = vector.load %arg4[%c0_7, %c0_8, %c0_9] : memref<4x1x1xf32, #tpu.memory_space<vmem>>, vector<4x1x1xf32>
    %19 = vector.broadcast %18 : vector<4x1x1xf32> to vector<4x16x16xf32>
    %20 = arith.mulf %17, %19 : vector<4x16x16xf32>
    %c0_10 = arith.constant 0 : index
    %c0_11 = arith.constant 0 : index
    %c0_12 = arith.constant 0 : index
    %21 = vector.load %arg5[%c0_10, %c0_11, %c0_12] : memref<4x1x1xf32, #tpu.memory_space<vmem>>, vector<4x1x1xf32>
    %22 = vector.broadcast %21 : vector<4x1x1xf32> to vector<4x16x16xf32>
    %23 = arith.addf %20, %22 : vector<4x16x16xf32>
    %c0_13 = arith.constant 0 : index
    %c0_14 = arith.constant 0 : index
    %c0_15 = arith.constant 0 : index
    %c0_16 = arith.constant 0 : index
    %24 = vector.load %arg6[%c0_13, %c0_14, %c0_15, %c0_16] : memref<1x4x16x16xf32, #tpu.memory_space<vmem>>, vector<1x4x16x16xf32>
    %25 = vector.shape_cast %24 : vector<1x4x16x16xf32> to vector<4x16x16xf32>
    %26 = vector.shape_cast %23 : vector<4x16x16xf32> to vector<1x4x16x16xf32>
    tpu.vector_store %arg6[%c0_13, %c0_14, %c0_15, %c0_16], %26 {strides = array<i32>} : memref<1x4x16x16xf32, #tpu.memory_space<vmem>>, vector<1x4x16x16xf32>,
    return
  }
  func.func @transform_0(%arg0: i32, %arg1: i32, %arg2: i32) -> (i32, i32, i32, i32) {
    %c0_i32 = arith.constant 0 : i32
    %c0_i32_0 = arith.constant 0 : i32
    return %arg0, %c0_i32, %arg1, %arg2 : i32, i32, i32, i32
  }
  func.func @transform_1(%arg0: i32, %arg1: i32, %arg2: i32) -> (i32, i32, i32) {
    %c0_i32 = arith.constant 0 : i32
    %c0_i32_0 = arith.constant 0 : i32
    %c0_i32_1 = arith.constant 0 : i32
    %c0_i32_2 = arith.constant 0 : i32
    return %c0_i32, %c0_i32_0, %c0_i32_1 : i32, i32, i32
  }
  func.func @transform_2(%arg0: i32, %arg1: i32, %arg2: i32) -> (i32, i32, i32) {
    %c0_i32 = arith.constant 0 : i32
    %c0_i32_0 = arith.constant 0 : i32
    %c0_i32_1 = arith.constant 0 : i32
    %c0_i32_2 = arith.constant 0 : i32
    return %c0_i32, %c0_i32_0, %c0_i32_1 : i32, i32, i32
  }
  func.func @transform_3(%arg0: i32, %arg1: i32, %arg2: i32) -> (i32, i32, i32, i32) {
    %c0_i32 = arith.constant 0 : i32
    %c0_i32_0 = arith.constant 0 : i32
    return %arg0, %c0_i32, %arg1, %arg2 : i32, i32, i32, i32
  }
}

</mosaic_0001>

<llo_original>
// kernel: tpu_custom_call.1
$region0: #{tpu_custom_call.1}
  #allocation0 [shape = 'u32[]', space=smem, size = 0x4, offset = 0x4, fixed_abs, tag = 'smem constant byte address 0x4 - core index']
  #allocation1 [shape = 'u32[144,128]{1,0:T(1,128)}', space=vmem, size = 0x12000, scoped, tag = 'internal scratch']
  %s0 = inlined_call_operand.hbm [shape: f32[2,4,16,16], index: 0, kind: input, shape index: {}]
  %s1 = inlined_call_operand.vmem [shape: f32[4,1,1], index: 1, kind: input, shape index: {}]
  %s2 = inlined_call_operand.vmem [shape: f32[4,1,1], index: 2, kind: input, shape index: {}]
  %s3 = inlined_call_operand.hbm [shape: f32[2,4,16,16], index: 3, kind: output, shape index: {}]
  %s4 = sld [smem:[#allocation0]]
  $region49: #{tpu_custom_call.1} parent=0
    _
  %s6 = ssub.s32 1, %s4
  %s7 = scalar_select 0, %s6, %s4
  $region1: #{tpu_custom_call.1} parent=0
    #allocation2 [shape = 'u8[65536]{0}', space=vmem, size = 0x10000, scoped, tag = 'input window, operand 0']
    #allocation3 [shape = 's32[2]{0}', space=sflag, size = 0x8, scoped, tag = 'scoped memory for tpu_custom_call.1']
    #allocation4 [shape = 's32[2]{0}', space=sflag, size = 0x8, scoped, tag = 'scoped memory for tpu_custom_call.1']
    #allocation5 [shape = 'u8[65536]{0}', space=vmem, size = 0x10000, scoped, tag = 'output window, operand 0']
    %8 = vsyncpa [#allocation3], 0
    %s9 = scalar_lea.sflag [#allocation3], 1
    %10 = vsyncpa %s9, 0
    %11 = vsyncpa [#allocation4], 0
    %s12 = scalar_lea.sflag [#allocation4], 1
    %13 = vsyncpa %s12, 0
    loop: start=0, step=1, limit=4
    $region2: #{tpu_custom_call.1} parent=1 // loop_pre_header
      _
    $region3: #{tpu_custom_call.1} parent=1 // loop_header
      %s15 = sphi 0, %s19
      %p16 = scmp.ge.s32.totalorder %s15, 4
      %s22 = sphi 0, %s41
      %s23 = sphi 0, %s37
      %s24 = sphi 0, %s33
      %s25 = sphi 0, %s22
      %s26 = sphi 0, %s23
      %s27 = sphi 0, %s24
      %s28 = sphi 0, %s25
      %s29 = sphi 0, %s26
      %s30 = sphi 0, %s27
      %s48 = sphi 0, %s50
      %s51 = sphi 0, %s48
      %s52 = sphi 0, %s51
      %s68 = sphi 0, %s52
      %s72 = sphi 0, %s72
      %s74 = sphi 0, %s72
      %s75 = sphi 0, %s74
      %s89 = sphi 0, %s75
      %s93 = sphi 0, %s93
      %s95 = sphi 0, %s93
      %s96 = sphi 0, %s95
      %s110 = sphi 0, %s96
      %s120 = sphi 0, %s122
      %s123 = sphi 0, %s120
      %s124 = sphi 0, %s123
      %s140 = sphi 0, %s124
    $region4: #{tpu_custom_call.1} parent=1 // loop_header_branch
      %18 = sbr.rel (%p16) target = $region8
    $region5: #{tpu_custom_call.1} parent=1 // loop_body
      %s20 = ssub.s32 %s15, 1
      %s21 = ssub.s32 %s15, 2
      %s31 = sadd.s32 1, %s24
      %p32 = scmp.ge.s32.totalorder %s31, 1
      %s33 = scalar_select %p32, 0, %s31
      %s34 = sadd.s32 1, %s23
      %s35 = scalar_select %p32, %s34, %s23
      %p36 = scmp.ge.s32.totalorder %s35, 1
      %s37 = scalar_select %p36, 0, %s35
      %s38 = sadd.s32 1, %s22
      %s39 = scalar_select %p36, %s38, %s22
      %p40 = scmp.ge.s32.totalorder %s39, 2
      %s41 = scalar_select %p40, 0, %s39
      %s42 = ssub.s32 %s22, %s41
      %s43 = ssub.s32 %s23, %s37
      %s44 = sor.u32 %s42, %s43
      %s45 = ssub.s32 %s24, %s33
      %s46 = sor.u32 %s44, %s45
      %p47 = scmp.eq.s32.totalorder %s46, 0
      %s49 = sadd.s32 %s48, 1
      %s50 = scalar_select %p47, %s48, %s49
      %p53 = pneg %p47
      %p54 = scmp.eq.s32.totalorder %s15, 1
      %p55 = por %p53, %p54
      %p56 = scmp.ne.s32.totalorder %s48, %s51
      %p57 = scmp.eq.s32.totalorder %s15, 0
      %p58 = por %p56, %p57
      %p59 = scmp.ne.s32.totalorder %s48, %s51
      %p60 = scmp.eq.s32.totalorder %s20, 1
      %p61 = por %p59, %p60
      %p62 = scmp.ne.s32.totalorder %s51, %s52
      %p63 = scmp.eq.s32.totalorder %s20, 0
      %p64 = por %p62, %p63
      %p65 = scmp.ne.s32.totalorder %s51, %s52
      %p66 = scmp.eq.s32.totalorder %s21, 1
      %p67 = por %p65, %p66
      %p69 = scmp.ne.s32.totalorder %s52, %s68
      %p70 = scmp.eq.s32.totalorder %s21, 0
      %p71 = por %p69, %p70
      %s73 = sadd.s32 %s72, 1
      %p76 = scmp.eq.s32.totalorder %s15, 1
      %p77 = scmp.ne.s32.totalorder %s72, %s74
      %p78 = scmp.eq.s32.totalorder %s15, 0
      %p79 = por %p77, %p78
      %p80 = scmp.ne.s32.totalorder %s72, %s74
      %p81 = scmp.eq.s32.totalorder %s20, 1
      %p82 = por %p80, %p81
      %p83 = scmp.ne.s32.totalorder %s74, %s75
      %p84 = scmp.eq.s32.totalorder %s20, 0
      %p85 = por %p83, %p84
      %p86 = scmp.ne.s32.totalorder %s74, %s75
      %p87 = scmp.eq.s32.totalorder %s21, 1
      %p88 = por %p86, %p87
      %p90 = scmp.ne.s32.totalorder %s75, %s89
      %p91 = scmp.eq.s32.totalorder %s21, 0
      %p92 = por %p90, %p91
      %s94 = sadd.s32 %s93, 1
      %p97 = scmp.eq.s32.totalorder %s15, 1
      %p98 = scmp.ne.s32.totalorder %s93, %s95
      %p99 = scmp.eq.s32.totalorder %s15, 0
      %p100 = por %p98, %p99
      %p101 = scmp.ne.s32.totalorder %s93, %s95
      %p102 = scmp.eq.s32.totalorder %s20, 1
      %p103 = por %p101, %p102
      %p104 = scmp.ne.s32.totalorder %s95, %s96
      %p105 = scmp.eq.s32.totalorder %s20, 0
      %p106 = por %p104, %p105
      %p107 = scmp.ne.s32.totalorder %s95, %s96
      %p108 = scmp.eq.s32.totalorder %s21, 1
      %p109 = por %p107, %p108
      %p111 = scmp.ne.s32.totalorder %s96, %s110
      %p112 = scmp.eq.s32.totalorder %s21, 0
      %p113 = por %p111, %p112
      %s114 = ssub.s32 %s22, %s41
      %s115 = ssub.s32 %s23, %s37
      %s116 = sor.u32 %s114, %s115
      %s117 = ssub.s32 %s24, %s33
      %s118 = sor.u32 %s116, %s117
      %p119 = scmp.eq.s32.totalorder %s118, 0
      %s121 = sadd.s32 %s120, 1
      %s122 = scalar_select %p119, %s120, %s121
      %p125 = pneg %p119
      %p126 = scmp.eq.s32.totalorder %s15, 1
      %p127 = por %p125, %p126
      %p128 = scmp.ne.s32.totalorder %s120, %s123
      %p129 = scmp.eq.s32.totalorder %s15, 0
      %p130 = por %p128, %p129
      %p131 = scmp.ne.s32.totalorder %s120, %s123
      %p132 = scmp.eq.s32.totalorder %s20, 1
      %p133 = por %p131, %p132
      %p134 = scmp.ne.s32.totalorder %s123, %s124
      %p135 = scmp.eq.s32.totalorder %s20, 0
      %p136 = por %p134, %p135
      %p137 = scmp.ne.s32.totalorder %s123, %s124
      %p138 = scmp.eq.s32.totalorder %s21, 1
      %p139 = por %p137, %p138
      %p141 = scmp.ne.s32.totalorder %s124, %s140
      %p142 = scmp.eq.s32.totalorder %s21, 0
      %p143 = por %p141, %p142
      %p144 = scmp.le.s32.totalorder 1, %s15
      %p145 = scmp.lt.s32.totalorder %s15, 3
      %p146 = pnand %p144, %p145
      %p147 = pneg %p146
      // Predicated region
      $region9: #{tpu_custom_call.1} parent=5 // pred_check
        _
      $region10: #{tpu_custom_call.1} parent=5 // pred_check_branch
        %149 = sbr.rel (%p146) target = $region12
      $region11: #{tpu_custom_call.1} parent=5 // pred_region
        %s150 = ssub.s32 %s15, 1
        // Predicated region
        $region13: #{tpu_custom_call.1} parent=11 // pred_check
          %p151 = pneg %p85
        $region14: #{tpu_custom_call.1} parent=11 // pred_check_branch
          %153 = sbr.rel (%p151) target = $region16
        $region15: #{tpu_custom_call.1} parent=11 // pred_region
          _
        $region16: #{tpu_custom_call.1} parent=11 // pred_fallthru
          _
        // Predicated region
        $region17: #{tpu_custom_call.1} parent=11 // pred_check
          %p154 = pneg %p106
        $region18: #{tpu_custom_call.1} parent=11 // pred_check_branch
          %156 = sbr.rel (%p154) target = $region20
        $region19: #{tpu_custom_call.1} parent=11 // pred_region
          _
        $region20: #{tpu_custom_call.1} parent=11 // pred_fallthru
          _
      $region12: #{tpu_custom_call.1} parent=5 // pred_fallthru
        _
      %p157 = scmp.lt.s32.totalorder %s15, 2
      // Predicated region
      $region21: #{tpu_custom_call.1} parent=5 // pred_check
        %p158 = pneg %p157
      $region22: #{tpu_custom_call.1} parent=5 // pred_check_branch
        %160 = sbr.rel (%p158) target = $region24
      $region23: #{tpu_custom_call.1} parent=5 // pred_region
        // Predicated region
        $region25: #{tpu_custom_call.1} parent=23 // pred_check
          %p161 = pneg %p58
        $region26: #{tpu_custom_call.1} parent=23 // pred_check_branch
          %163 = sbr.rel (%p161) target = $region28
        $region27: #{tpu_custom_call.1} parent=23 // pred_region
          %s164 = sand.u32 %s48, 1
          %s165 = scalar_lea.sflag [#allocation3], %s164
          %s166 = sand.u32 %s48, 1
          %s167 = smul.addr %s166, 64
          %s168 = scalar_lea.vmem [#allocation2], %s167
          %s169 = smul.u32 2, %s23
          %s171 = ssub.s32 1024, 1024
          %172 = vsyncadd %s165, %s171
          %s173 = sadd.s32 %s24, %s169
          %s174 = smul.addr %s22, 8
          %s175 = sadd.s32 %s173, %s174
          %s176 = smul.addr %s175, 128
          %s177 = scalar_lea.hbm %s0, %s176
          %s178 = sshll.u32 %s168, 4
          %s179 = int_to_ptr.vmem [resolvable:$true] %s178
          %184 = dma.hbm_to_vmem [thread:$0]  %s177, 1024, %s179, %s165, 128, 128, 8
        $region28: #{tpu_custom_call.1} parent=23 // pred_fallthru
          _
      $region24: #{tpu_custom_call.1} parent=5 // pred_fallthru
        _
      %p185 = scmp.le.s32.totalorder 1, %s15
      %p186 = scmp.lt.s32.totalorder %s15, 3
      %p187 = pnand %p185, %p186
      %p188 = pneg %p187
      // Predicated region
      $region29: #{tpu_custom_call.1} parent=5 // pred_check
        _
      $region30: #{tpu_custom_call.1} parent=5 // pred_check_branch
        %190 = sbr.rel (%p187) target = $region32
      $region31: #{tpu_custom_call.1} parent=5 // pred_region
        %s191 = ssub.s32 %s15, 1
        %s192 = sand.u32 %s51, 1
        %s193 = scalar_lea.sflag [#allocation3], %s192
        %s194 = sand.u32 %s51, 1
        %s195 = smul.addr %s194, 64
        %s196 = scalar_lea.vmem [#allocation2], %s195
        // Predicated region
        $region33: #{tpu_custom_call.1} parent=31 // pred_check
          %p197 = pneg %p64
        $region34: #{tpu_custom_call.1} parent=31 // pred_check_branch
          %199 = sbr.rel (%p197) target = $region36
        $region35: #{tpu_custom_call.1} parent=31 // pred_region
          %200 = dma.done %s193, 1024
        $region36: #{tpu_custom_call.1} parent=31 // pred_fallthru
          _
        %s201 = sand.u32 %s51, 1
        %s202 = scalar_lea.sflag [#allocation3], %s201
        %s203 = sand.u32 %s51, 1
        %s204 = smul.addr %s203, 64
        %s205 = scalar_lea.vmem [#allocation2], %s204
        %p206 = pneg %p64
        %p207 = pneg %p61
        %p208 = pneg %p85
        %p209 = pneg %p82
        %p210 = pneg %p106
        %p211 = pneg %p103
        %p212 = pneg %p136
        %p213 = pneg %p133
        %s214 = sand.u32 %s123, 1
        %s215 = scalar_lea.sflag [#allocation4], %s214
        %s216 = sand.u32 %s123, 1
        %s217 = smul.addr %s216, 64
        %s218 = scalar_lea.vmem [#allocation5], %s217
        %s219 = smul.u32 2, %s26
        %s220 = smul.u32 2, %s26
        %v221 = vld [vmem:[%s196] sm:$0xff]
        %v222 = vld [vmem:[%s196 + $0x8] sm:$0xff]
        %v223 = vld [vmem:[%s196 + $0x10] sm:$0xff]
        %v224 = vld [vmem:[%s196 + $0x18] sm:$0xff]
        %v225 = vld [vmem:[%s196 + $0x20] sm:$0xff]
        %v226 = vld [vmem:[%s196 + $0x28] sm:$0xff]
        %v227 = vld [vmem:[%s196 + $0x30] sm:$0xff]
        %v228 = vld [vmem:[%s196 + $0x38] sm:$0xff]
        %vm229 = vcmask 130048
        %v230 = vsel %vm229, %v221, 0.0
        %v231 = vsel %vm229, %v223, 0.0
        %v232 = vadd.f32 %v230, %v231
        %v233 = vsel %vm229, %v225, 0.0
        %v234 = vadd.f32 %v232, %v233
        %v235 = vsel %vm229, %v227, 0.0
        %v236 = vadd.f32 %v234, %v235
        %v237 = vsel %vm229, %v222, 0.0
        %v238 = vsel %vm229, %v224, 0.0
        %v239 = vadd.f32 %v237, %v238
        %v240 = vsel %vm229, %v226, 0.0
        %v241 = vadd.f32 %v239, %v240
        %v242 = vsel %vm229, %v228, 0.0
        %v243 = vadd.f32 %v241, %v242
        %v244 = vmul.f32 %v236, 0.25
        %v245 = vmul.f32 %v243, 0.25
        %v246 = vsub.f32 %v221, %v244
        %v247 = vsub.f32 %v222, %v245
        %v248 = vsub.f32 %v223, %v244
        %v249 = vsub.f32 %v224, %v245
        %v250 = vsub.f32 %v225, %v244
        %v251 = vsub.f32 %v226, %v245
        %v252 = vsub.f32 %v227, %v244
        %v253 = vsub.f32 %v228, %v245
        %v254 = vmul.f32 %v246, %v246
        %v255 = vmul.f32 %v247, %v247
        %v256 = vmul.f32 %v248, %v248
        %v257 = vmul.f32 %v249, %v249
        %v258 = vmul.f32 %v250, %v250
        %v259 = vmul.f32 %v251, %v251
        %v260 = vmul.f32 %v252, %v252
        %v261 = vmul.f32 %v253, %v253
        %v262 = vsel %vm229, %v254, 0.0
        %v263 = vsel %vm229, %v256, 0.0
        %v264 = vadd.f32 %v262, %v263
        %v265 = vsel %vm229, %v258, 0.0
        %v266 = vadd.f32 %v264, %v265
        %v267 = vsel %vm229, %v260, 0.0
        %v268 = vadd.f32 %v266, %v267
        %v269 = vsel %vm229, %v255, 0.0
        %v270 = vsel %vm229, %v257, 0.0
        %v271 = vadd.f32 %v269, %v270
        %v272 = vsel %vm229, %v259, 0.0
        %v273 = vadd.f32 %v271, %v272
        %v274 = vsel %vm229, %v261, 0.0
        %v275 = vadd.f32 %v273, %v274
        %v276 = vmul.f32 %v268, 0.25
        %v277 = vmul.f32 %v275, 0.25
        %v278 = vadd.f32 %v276, 1e-05
        %v279 = vadd.f32 %v277, 1e-05
        %v280 = vrsqrt.pop %v278
        %v281 = vrsqrt.pop %v279
        %v282 = vmul.f32 %v246, %v280
        %v283 = vmul.f32 %v247, %v281
        %v284 = vmul.f32 %v248, %v280
        %v285 = vmul.f32 %v249, %v281
        %v286 = vmul.f32 %v250, %v280
        %v287 = vmul.f32 %v251, %v281
        %v288 = vmul.f32 %v252, %v280
        %v289 = vmul.f32 %v253, %v281
        %v290 = vld [vmem:[%s1] sm:$0x1]
        %v291 = vld [vmem:[%s1 + $0x1] sm:$0x1]
        %v292 = vld [vmem:[%s1 + $0x2] sm:$0x1]
        %v293 = vld [vmem:[%s1 + $0x3] sm:$0x1]
        %v298 = vlaneseq
        %v299 = vshrl.u32 %v298, 7
        %v300 = vsub.s32 0, %v299
        %v301 = vrot.slane %v290, %v300
        %v302 = vlaneseq
        %v303 = vshrl.u32 %v302, 7
        %v304 = vsub.s32 0, %v303
        %v305 = vrot.slane %v291, %v304
        %v306 = vlaneseq
        %v307 = vshrl.u32 %v306, 7
        %v308 = vsub.s32 0, %v307
        %v309 = vrot.slane %v292, %v308
        %v310 = vlaneseq
        %v311 = vshrl.u32 %v310, 7
        %v312 = vsub.s32 0, %v311
        %v313 = vrot.slane %v293, %v312
        %314 = vset.pattern.permute.xlu0 0
        %315 = vperm.xlu0 %314, %v301
        %v316 = vpop.permute.xlu0 %315
        %318 = vset.pattern.permute.xlu0 0
        %319 = vperm.xlu0 %318, %v305
        %v320 = vpop.permute.xlu0 %319
        %322 = vset.pattern.permute.xlu0 0
        %323 = vperm.xlu0 %322, %v309
        %v324 = vpop.permute.xlu0 %323
        %326 = vset.pattern.permute.xlu0 0
        %327 = vperm.xlu0 %326, %v313
        %v328 = vpop.permute.xlu0 %327
        %v330 = vmul.f32 %v282, %v316
        %v331 = vmul.f32 %v283, %v316
        %v332 = vmul.f32 %v284, %v320
        %v333 = vmul.f32 %v285, %v320
        %v334 = vmul.f32 %v286, %v324
        %v335 = vmul.f32 %v287, %v324
        %v336 = vmul.f32 %v288, %v328
        %v337 = vmul.f32 %v289, %v328
        %v338 = vld [vmem:[%s2] sm:$0x1]
        %v339 = vld [vmem:[%s2 + $0x1] sm:$0x1]
        %v340 = vld [vmem:[%s2 + $0x2] sm:$0x1]
        %v341 = vld [vmem:[%s2 + $0x3] sm:$0x1]
        %v346 = vlaneseq
        %v347 = vshrl.u32 %v346, 7
        %v348 = vsub.s32 0, %v347
        %v349 = vrot.slane %v338, %v348
        %v350 = vlaneseq
        %v351 = vshrl.u32 %v350, 7
        %v352 = vsub.s32 0, %v351
        %v353 = vrot.slane %v339, %v352
        %v354 = vlaneseq
        %v355 = vshrl.u32 %v354, 7
        %v356 = vsub.s32 0, %v355
        %v357 = vrot.slane %v340, %v356
        %v358 = vlaneseq
        %v359 = vshrl.u32 %v358, 7
        %v360 = vsub.s32 0, %v359
        %v361 = vrot.slane %v341, %v360
        %362 = vset.pattern.permute.xlu0 0
        %363 = vperm.xlu0 %362, %v349
        %v364 = vpop.permute.xlu0 %363
        %366 = vset.pattern.permute.xlu0 0
        %367 = vperm.xlu0 %366, %v353
        %v368 = vpop.permute.xlu0 %367
        %370 = vset.pattern.permute.xlu0 0
        %371 = vperm.xlu0 %370, %v357
        %v372 = vpop.permute.xlu0 %371
        %374 = vset.pattern.permute.xlu0 0
        %375 = vperm.xlu0 %374, %v361
        %v376 = vpop.permute.xlu0 %375
        %v378 = vadd.f32 %v330, %v364
        %v379 = vadd.f32 %v331, %v364
        %v380 = vadd.f32 %v332, %v368
        %v381 = vadd.f32 %v333, %v368
        %v382 = vadd.f32 %v334, %v372
        %v383 = vadd.f32 %v335, %v372
        %v384 = vadd.f32 %v336, %v376
        %v385 = vadd.f32 %v337, %v376
        %386 = vst.msk [vmem:[%s218] sm:$0xff] %vm229, %v378
        %387 = vst.msk [vmem:[%s218 + $0x8] sm:$0xff] %vm229, %v379
        %388 = vst.msk [vmem:[%s218 + $0x10] sm:$0xff] %vm229, %v380
        %389 = vst.msk [vmem:[%s218 + $0x18] sm:$0xff] %vm229, %v381
        %390 = vst.msk [vmem:[%s218 + $0x20] sm:$0xff] %vm229, %v382
        %391 = vst.msk [vmem:[%s218 + $0x28] sm:$0xff] %vm229, %v383
        %392 = vst.msk [vmem:[%s218 + $0x30] sm:$0xff] %vm229, %v384
        %393 = vst.msk [vmem:[%s218 + $0x38] sm:$0xff] %vm229, %v385
        %s394 = sand.u32 %s123, 1
        %s395 = scalar_lea.sflag [#allocation4], %s394
        %s396 = sand.u32 %s123, 1
        %s397 = smul.addr %s396, 64
        %s398 = scalar_lea.vmem [#allocation5], %s397
        // Predicated region
        $region37: #{tpu_custom_call.1} parent=31 // pred_check
          %p399 = pneg %p133
        $region38: #{tpu_custom_call.1} parent=31 // pred_check_branch
          %401 = sbr.rel (%p399) target = $region40
        $region39: #{tpu_custom_call.1} parent=31 // pred_region
          %s402 = smul.u32 2, %s26
          %s404 = ssub.s32 1024, 1024
          %405 = vsyncadd %s395, %s404
          %s406 = sadd.s32 %s27, %s402
          %s407 = smul.addr %s25, 8
          %s408 = sadd.s32 %s406, %s407
          %s409 = smul.addr %s408, 128
          %s410 = scalar_lea.hbm %s3, %s409
          %s411 = sshll.u32 %s398, 4
          %s412 = int_to_ptr.vmem [resolvable:$true] %s411
          %417 = dma.vmem_to_hbm [thread:$0]  %s412, 1024, %s410, %s395, 128, 128, 8
        $region40: #{tpu_custom_call.1} parent=31 // pred_fallthru
          _
      $region32: #{tpu_custom_call.1} parent=5 // pred_fallthru
        _
      %p418 = scmp.le.s32.totalorder 2, %s15
      // Predicated region
      $region41: #{tpu_custom_call.1} parent=5 // pred_check
        %p419 = pneg %p418
      $region42: #{tpu_custom_call.1} parent=5 // pred_check_branch
        %421 = sbr.rel (%p419) target = $region44
      $region43: #{tpu_custom_call.1} parent=5 // pred_region
        %s422 = ssub.s32 %s15, 2
        // Predicated region
        $region45: #{tpu_custom_call.1} parent=43 // pred_check
          %p423 = pneg %p139
        $region46: #{tpu_custom_call.1} parent=43 // pred_check_branch
          %425 = sbr.rel (%p423) target = $region48
        $region47: #{tpu_custom_call.1} parent=43 // pred_region
          %s426 = sand.u32 %s124, 1
          %s427 = scalar_lea.sflag [#allocation4], %s426
          %s428 = sand.u32 %s124, 1
          %s429 = smul.addr %s428, 64
          %s430 = scalar_lea.vmem [#allocation5], %s429
          %431 = dma.done %s427, 1024
        $region48: #{tpu_custom_call.1} parent=43 // pred_fallthru
          _
      $region44: #{tpu_custom_call.1} parent=5 // pred_fallthru
        _
    $region6: #{tpu_custom_call.1} parent=1 // loop_footer
      %s19 = sadd.s32 1, %s15
    $region7: #{tpu_custom_call.1} parent=1 // loop_footer_branch
      %14 = sbr.rel target = $region3
    $region8: #{tpu_custom_call.1} parent=1 // loop_exit
      _
    %432 = vsyncpa [#allocation3], 1
    %s433 = scalar_lea.sflag [#allocation3], 1
    %434 = vsyncpa %s433, 1
    %435 = vsyncpa [#allocation4], 1
    %s436 = scalar_lea.sflag [#allocation4], 1
    %437 = vsyncpa %s436, 1

</llo_original>
